<compile_context>
chip_gen: v5e
topology: v5e:2x2
jax: 0.10.0
libtpu: 0.0.40
codegen_flags: <defaults>
</compile_context>

<pallas_src>
from itertools import chain, combinations_with_replacement

import jax
import jax.numpy as jnp
import numpy as np
from jax.experimental import pallas as pl
from jax.experimental.pallas import tpu as pltpu


def _neighbour_offsets(num_neighbours: int):
    # torch: inds = [i - num_neighbours for i in range(2*num_neighbours + 1)]
    return [i - num_neighbours for i in range(2 * num_neighbours + 1)]


def _poly_combos(p: int, degree: int, include_bias: bool):
    """Monomial index tuples in SparsePolynomialFeatures.full_polynomial order."""
    start = 0 if include_bias else 1
    return list(
        chain.from_iterable(
            combinations_with_replacement(range(p), i) for i in range(start, degree + 1)
        )
    )


def _selection_matrices(combos, p: int, n_factors: int) -> np.ndarray:
    """(n_factors, p+1, F) 0/1 selectors.

    Column f of slot k has exactly one 1: it picks the k-th variable of monomial f,
    or the trailing ones column (index p) when the monomial has fewer than k+1
    factors, so prod_k (x_aug @ sel[k])[:, f] == the f-th monomial.
    """
    num_features = len(combos)
    sel = np.zeros((n_factors, p + 1, num_features), dtype=np.float32)
    for f, c in enumerate(combos):
        for k in range(n_factors):
            j = c[k] if k < len(c) else p  # index p == the ones column
            sel[k, j, f] = 1.0
    return sel


def _pick_group(n_rows: int, p1: int, num_features: int,
                max_k: int = 128, max_n: int = 512) -> int:
    """Largest g dividing n_rows with g*(P+1) <= 128 (one MXU K pass) and
    g*F <= 512 (lane-dense output without blowing up VMEM)."""
    g_cap = max(1, min(max_k // p1, max(1, max_n // num_features)))
    for g in range(min(g_cap, n_rows), 0, -1):
        if n_rows % g == 0:
            return g
    return 1


def _make_kernel(n_factors: int):
    def kernel(sel_ref, xin_ref, o_ref):
        # xin: (TR, g*(P+1)) packed neighbour values (+ ones columns).
        xin = xin_ref[...].astype(jnp.float32)
        # Each factor slot is a 0/1 block-diagonal selection matmul on the MXU;
        # the feature tensor is the elementwise product of the factor slots.
        acc = jnp.dot(xin, sel_ref[0], preferred_element_type=jnp.float32)
        for k in range(1, n_factors):                      # small static degree
            acc = acc * jnp.dot(xin, sel_ref[k], preferred_element_type=jnp.float32)
        o_ref[...] = acc.astype(o_ref.dtype)

    return kernel


def sparse_polynomial_neighbour_1d(x, *, degree=2, include_bias=True,
                                   num_neighbours=2, sparse_index=None,
                                   row_tile=1024):
    """Pallas equivalent of SparsePolynomialNeighbour1D(...).forward(x).

    Args:
      x: (..., dim) array, dim >= 3.
    Returns:
      (..., dim, num_features) array (same layout as the PyTorch module).
    """
    if degree < 1:
        raise ValueError("degree must be >= 1")
    offsets = _neighbour_offsets(num_neighbours)
    p = len(offsets)                                         # 2*nn + 1 neighbour vars
    combos = _poly_combos(p, degree, include_bias)
    if sparse_index is not None:                             # module default: all features
        combos = [combos[i] for i in sparse_index]
    num_features = len(combos)
    n_factors = degree

    orig_shape = x.shape
    dim = orig_shape[-1]
    assert dim >= 3, "SparsePolynomialNeighbour1D requires dim >= 3"
    x2d = x.reshape(-1, dim)
    n_rows = x2d.shape[0] * dim                              # flattened (..., dim) sites

    # Neighbour stack + ones column, built once in XLA (circular rolls on the full
    # dim axis -> the row packing / tiling below can never break the wrap-around).
    neigh = [jnp.roll(x2d, s, axis=-1) for s in offsets]
    x_aug = jnp.stack(neigh + [jnp.ones_like(x2d)], axis=-1)  # (B, dim, P+1)

    # Pack g sites per kernel row (pure metadata reshapes on both input and output).
    g = _pick_group(n_rows, p + 1, num_features)
    rows_packed = n_rows // g
    kp = g * (p + 1)                                         # packed K (<= 128)
    fp = g * num_features                                    # packed, lane-dense F
    x_pack = x_aug.reshape(rows_packed, kp)

    # Block-diagonal 0/1 selectors: packed site i only reads its own P+1 columns.
    sel_small = _selection_matrices(combos, p, n_factors)
    eye_g = np.eye(g, dtype=np.float32)
    sel = jnp.asarray(
        np.stack([np.kron(eye_g, sel_small[k]) for k in range(n_factors)], axis=0)
    )                                                        # (n_factors, kp, fp)

    tr = int(min(row_tile, rows_packed))                     # row_tile is a multiple of 8
    grid = (pl.cdiv(rows_packed, tr),)

    # VMEM per step (f32, lane dims padded): in 2*tr*kp*4 + out 2*tr*fp*4 + a few
    # (tr, fp) temps.  Worst case (kp=128, fp=512, tr=1024) ~= 11 MiB << 32 MiB.
    out = pl.pallas_call(
        _make_kernel(n_factors),
        out_shape=jax.ShapeDtypeStruct((rows_packed, fp), x.dtype),
        grid=grid,
        in_specs=[
            # Small constant selector stack; block index never changes -> fetched once.
            pl.BlockSpec((n_factors, kp, fp), lambda i: (0, 0, 0)),
            # Packed-row tile of the neighbour matrix.
            pl.BlockSpec((tr, kp), lambda i: (i, 0)),
        ],
        out_specs=pl.BlockSpec((tr, fp), lambda i: (i, 0)),
        compiler_params=pltpu.CompilerParams(
            dimension_semantics=("parallel",),
            vmem_limit_bytes=32 * 1024 * 1024,
        ),
    )(sel, x_pack)

    # Pure metadata reshape back to the PyTorch layout (..., dim, num_features).
    return out.reshape(*orig_shape, num_features)


def _reference(x, *, degree=2, include_bias=True, num_neighbours=2, sparse_index=None):
    """Pure-JAX reference mirroring the PyTorch forward (roll + explicit products)."""
    offsets = _neighbour_offsets(num_neighbours)
    combos = _poly_combos(len(offsets), degree, include_bias)
    if sparse_index is not None:
        combos = [combos[i] for i in sparse_index]
    x_in = jnp.stack([jnp.roll(x, s, axis=-1) for s in offsets], axis=-1)  # (..., D, P)
    feats = [x_in[..., list(c)].prod(-1) for c in combos]                  # Polynomial()
    return jnp.stack(feats, axis=-1)


def _check(x, **cfg):
    out = jax.block_until_ready(sparse_polynomial_neighbour_1d(x, **cfg))
    ref = _reference(x, **cfg)
    assert out.shape == ref.shape, (out.shape, ref.shape)
    assert jnp.allclose(out, ref, rtol=1e-5, atol=1e-6), float(jnp.max(jnp.abs(out - ref)))
    return out


if __name__ == "__main__":
    key = jax.random.PRNGKey(0)
    k1, k2 = jax.random.split(key)

    # Module default config: degree=2, num_neighbours=2, include_bias=True -> F=21.
    # Small shapes: (batch=2, channels=4, spatial dim=16) -> 128 lattice sites.
    x = jax.random.normal(k1, (2, 4, 16), dtype=jnp.float32)
    # Keep the demo values bf16-representable so the kernel's 0/1 selection matmuls
    # are bit-exact against the pure-f32 reference regardless of MXU precision mode.
    x = x.astype(jnp.bfloat16).astype(jnp.float32)
    out = _check(x, degree=2, include_bias=True, num_neighbours=2)
    assert out.shape == (2, 4, 16, 21), out.shape

    # Second config exercising degree=3 / num_neighbours=1 (P=3, F=20).
    x2 = jax.random.normal(k2, (3, 4, 8), dtype=jnp.float32)
    x2 = x2.astype(jnp.bfloat16).astype(jnp.float32)
    out2 = _check(x2, degree=3, include_bias=True, num_neighbours=1)
    assert out2.shape == (3, 4, 8, 20), out2.shape

    print("KERNEL_OK")
</pallas_src>

<mosaic_0001>
module attributes {stable_mosaic.version = 11 : i64} {
  func.func @kernel(%arg0: i32, %arg1: memref<2x96x336xf32, #tpu.memory_space<vmem>>, %arg2: memref<8x96xf32, #tpu.memory_space<vmem>>, %arg3: memref<8x336xf32, #tpu.memory_space<vmem>>) attributes {dimension_semantics = [#tpu.dimension_semantics<parallel>], iteration_bounds = array<i64: 1>, scalar_prefetch = 0 : i64, scratch_operands = 0 : i64, tpu.core_type = #tpu.core_type<tc>, window_params = [{pipeline_mode = #tpu.pipeline_mode<synchronous>, transform_indices = @transform_0, window_bounds = array<i64: 2, 96, 336>}, {transform_indices = @transform_1, window_bounds = array<i64: 8, 96>}, {transform_indices = @transform_2, window_bounds = array<i64: 8, 336>}]} {
    %c0 = arith.constant 0 : index
    %c0_0 = arith.constant 0 : index
    %0 = vector.load %arg2[%c0, %c0_0] : memref<8x96xf32, #tpu.memory_space<vmem>>, vector<8x96xf32>
    %c0_1 = arith.constant 0 : index
    %c0_2 = arith.constant 0 : index
    %c0_3 = arith.constant 0 : index
    %1 = vector.load %arg1[%c0_1, %c0_2, %c0_3] : memref<2x96x336xf32, #tpu.memory_space<vmem>>, vector<1x96x336xf32>
    %2 = vector.shape_cast %1 : vector<1x96x336xf32> to vector<96x336xf32>
    %cst = arith.constant dense<0.000000e+00> : vector<8x336xf32>
    %3 = tpu.matmul %0, %2, %cst {dimension_numbers = #tpu.dot_dimension_numbers<[1], [0], [0], [1], [0, 0, 1, 1], [], []>} : vector<8x96xf32>, vector<96x336xf32>, vector<8x336xf32> -> vector<8x336xf32>
    %c1 = arith.constant 1 : index
    %c0_4 = arith.constant 0 : index
    %c0_5 = arith.constant 0 : index
    %4 = vector.load %arg1[%c1, %c0_4, %c0_5] : memref<2x96x336xf32, #tpu.memory_space<vmem>>, vector<1x96x336xf32>
    %5 = vector.shape_cast %4 : vector<1x96x336xf32> to vector<96x336xf32>
    %cst_6 = arith.constant dense<0.000000e+00> : vector<8x336xf32>
    %6 = tpu.matmul %0, %5, %cst_6 {dimension_numbers = #tpu.dot_dimension_numbers<[1], [0], [0], [1], [0, 0, 1, 1], [], []>} : vector<8x96xf32>, vector<96x336xf32>, vector<8x336xf32> -> vector<8x336xf32>
    %7 = arith.mulf %3, %6 : vector<8x336xf32>
    %c0_7 = arith.constant 0 : index
    %c0_8 = arith.constant 0 : index
    %8 = vector.load %arg3[%c0_7, %c0_8] : memref<8x336xf32, #tpu.memory_space<vmem>>, vector<8x336xf32>
    tpu.vector_store %arg3[%c0_7, %c0_8], %7 {strides = array<i32>} : memref<8x336xf32, #tpu.memory_space<vmem>>, vector<8x336xf32>,
    return
  }
  func.func @transform_0(%arg0: i32) -> (i32, i32, i32) {
    %c0_i32 = arith.constant 0 : i32
    %c0_i32_0 = arith.constant 0 : i32
    %c0_i32_1 = arith.constant 0 : i32
    %c0_i32_2 = arith.constant 0 : i32
    return %c0_i32, %c0_i32_0, %c0_i32_1 : i32, i32, i32
  }
  func.func @transform_1(%arg0: i32) -> (i32, i32) {
    %c0_i32 = arith.constant 0 : i32
    %c0_i32_0 = arith.constant 0 : i32
    return %arg0, %c0_i32 : i32, i32
  }
  func.func @transform_2(%arg0: i32) -> (i32, i32) {
    %c0_i32 = arith.constant 0 : i32
    %c0_i32_0 = arith.constant 0 : i32
    return %arg0, %c0_i32 : i32, i32
  }
}

</mosaic_0001>

<llo_original>
// kernel: tpu_custom_call.1
$region0: #{tpu_custom_call.1}
  #allocation0 [shape = 'u32[]', space=smem, size = 0x4, offset = 0x4, fixed_abs, tag = 'smem constant byte address 0x4 - core index']
  #allocation1 [shape = 'u32[72,128]{1,0:T(1,128)}', space=vmem, size = 0x9000, scoped, tag = 'internal scratch']
  %s0 = inlined_call_operand.hbm [shape: f32[2,96,336], index: 0, kind: input, shape index: {}]
  %s1 = inlined_call_operand.hbm [shape: f32[8,96], index: 1, kind: input, shape index: {}]
  %s2 = inlined_call_operand.hbm [shape: f32[8,336], index: 2, kind: output, shape index: {}]
  %s3 = sld [smem:[#allocation0]]
  $region26: #{tpu_custom_call.1} parent=0
    _
  %s5 = ssub.s32 1, %s3
  %s6 = scalar_select 0, %s5, %s3
  $region1: #{tpu_custom_call.1} parent=0
    #allocation2 [shape = 'u8[294912]{0}', space=vmem, size = 0x48000, scoped, tag = 'input window, operand 0, single buffered']
    #allocation3 [shape = 's32[1]{0}', space=sflag, size = 0x4, scoped, tag = 'scoped memory for tpu_custom_call.1']
    #allocation4 [shape = 's32[1]{0}', space=sflag, size = 0x4, scoped, tag = 'scoped memory for tpu_custom_call.1']
    #allocation5 [shape = 'u8[4096]{0}', space=vmem, size = 0x1000, scoped, tag = 'input window, operand 1, single buffered']
    #allocation6 [shape = 's32[1]{0}', space=sflag, size = 0x4, scoped, tag = 'scoped memory for tpu_custom_call.1']
    #allocation7 [shape = 'u8[12288]{0}', space=vmem, size = 0x3000, scoped, tag = 'output window, operand 0, single buffered']
    %7 = vsyncpa [#allocation3], 0
    %8 = vsyncpa [#allocation6], 0
    %9 = vsyncpa [#allocation4], 0
    // Predicated region
    $region2: #{tpu_custom_call.1} parent=1 // pred_check
      _
    $region3: #{tpu_custom_call.1} parent=1 // pred_check_branch
      %11 = sbr.rel (0) target = $region5
    $region4: #{tpu_custom_call.1} parent=1 // pred_region
      %13 = vsyncadd [#allocation3], 0
      %s14 = sshll.u32 %s0, 4
      %s15 = int_to_ptr.hbm [resolvable:$true] %s14
      %s16 = sshll.u32 [#allocation2], 4
      %s17 = int_to_ptr.vmem [resolvable:$true] %s16
      %22 = dma.hbm_to_vmem [thread:$0]  %s15, 9216, %s17, [#allocation3], 384, 384, 24
    $region5: #{tpu_custom_call.1} parent=1 // pred_fallthru
      _
    // Predicated region
    $region6: #{tpu_custom_call.1} parent=1 // pred_check
      _
    $region7: #{tpu_custom_call.1} parent=1 // pred_check_branch
      %24 = sbr.rel (0) target = $region9
    $region8: #{tpu_custom_call.1} parent=1 // pred_region
      %26 = vsyncadd [#allocation6], 0
      %s28 = sshll.u32 %s1, 4
      %s29 = int_to_ptr.hbm [resolvable:$true] %s28
      %s30 = sshll.u32 [#allocation5], 4
      %s31 = int_to_ptr.vmem [resolvable:$true] %s30
      %33 = dma.hbm_to_vmem [thread:$0]  %s29, 128, %s31, [#allocation6]
    $region9: #{tpu_custom_call.1} parent=1 // pred_fallthru
      _
    // Predicated region
    $region10: #{tpu_custom_call.1} parent=1 // pred_check
      _
    $region11: #{tpu_custom_call.1} parent=1 // pred_check_branch
      %35 = sbr.rel (0) target = $region13
    $region12: #{tpu_custom_call.1} parent=1 // pred_region
      %37 = dma.done [#allocation3], 9216
    $region13: #{tpu_custom_call.1} parent=1 // pred_fallthru
      _
    // Predicated region
    $region14: #{tpu_custom_call.1} parent=1 // pred_check
      _
    $region15: #{tpu_custom_call.1} parent=1 // pred_check_branch
      %39 = sbr.rel (0) target = $region17
    $region16: #{tpu_custom_call.1} parent=1 // pred_region
      %41 = dma.done [#allocation6], 128
    $region17: #{tpu_custom_call.1} parent=1 // pred_fallthru
      _
    %v42 = vld [vmem:[#allocation5] sm:$0xff]
    %v43 = vld [vmem:[#allocation2] sm:$0xff]
    %v44 = vld [vmem:[#allocation2 + $0x8] sm:$0xff]
    %v45 = vld [vmem:[#allocation2 + $0x10] sm:$0xff]
    %v46 = vld [vmem:[#allocation2 + $0x18] sm:$0xff]
    %v47 = vld [vmem:[#allocation2 + $0x20] sm:$0xff]
    %v48 = vld [vmem:[#allocation2 + $0x28] sm:$0xff]
    %v49 = vld [vmem:[#allocation2 + $0x30] sm:$0xff]
    %v50 = vld [vmem:[#allocation2 + $0x38] sm:$0xff]
    %v51 = vld [vmem:[#allocation2 + $0x40] sm:$0xff]
    %v52 = vld [vmem:[#allocation2 + $0x48] sm:$0xff]
    %v53 = vld [vmem:[#allocation2 + $0x50] sm:$0xff]
    %v54 = vld [vmem:[#allocation2 + $0x58] sm:$0xff]
    %v55 = vld [vmem:[#allocation2 + $0x60] sm:$0xff]
    %v56 = vld [vmem:[#allocation2 + $0x68] sm:$0xff]
    %v57 = vld [vmem:[#allocation2 + $0x70] sm:$0xff]
    %v58 = vld [vmem:[#allocation2 + $0x78] sm:$0xff]
    %v59 = vld [vmem:[#allocation2 + $0x80] sm:$0xff]
    %v60 = vld [vmem:[#allocation2 + $0x88] sm:$0xff]
    %v61 = vld [vmem:[#allocation2 + $0x90] sm:$0xff]
    %v62 = vld [vmem:[#allocation2 + $0x98] sm:$0xff]
    %v63 = vld [vmem:[#allocation2 + $0xa0] sm:$0xff]
    %v64 = vld [vmem:[#allocation2 + $0xa8] sm:$0xff]
    %v65 = vld [vmem:[#allocation2 + $0xb0] sm:$0xff]
    %v66 = vld [vmem:[#allocation2 + $0xb8] sm:$0xff]
    %v67 = vld [vmem:[#allocation2 + $0xc0] sm:$0xff]
    %v68 = vld [vmem:[#allocation2 + $0xc8] sm:$0xff]
    %v69 = vld [vmem:[#allocation2 + $0xd0] sm:$0xff]
    %v70 = vld [vmem:[#allocation2 + $0xd8] sm:$0xff]
    %v71 = vld [vmem:[#allocation2 + $0xe0] sm:$0xff]
    %v72 = vld [vmem:[#allocation2 + $0xe8] sm:$0xff]
    %v73 = vld [vmem:[#allocation2 + $0xf0] sm:$0xff]
    %v74 = vld [vmem:[#allocation2 + $0xf8] sm:$0xff]
    %v75 = vld [vmem:[#allocation2 + $0x100] sm:$0xff]
    %v76 = vld [vmem:[#allocation2 + $0x108] sm:$0xff]
    %v77 = vld [vmem:[#allocation2 + $0x110] sm:$0xff]
    %v78 = vld [vmem:[#allocation2 + $0x118] sm:$0xff]
    %vm79 = vcmask 785408
    %v81 = vsel %vm79, %v42, 0
    %83 = vmatpush.msra.mxu0 0.0
    %84 = vmatpush.msra.mxu0 0.0
    %85 = vmatpush.msra.mxu0 0.0
    %86 = vmatpush.msra.mxu0 0.0
    %87 = vmatpush.msra.mxu0 %v76
    %88 = vmatpush.msra.mxu0 %v73
    %89 = vmatpush.msra.mxu0 %v70
    %90 = vmatpush.msra.mxu0 %v67
    %91 = vmatpush.msra.mxu0 %v64
    %92 = vmatpush.msra.mxu0 %v61
    %93 = vmatpush.msra.mxu0 %v58
    %94 = vmatpush.msra.mxu0 %v55
    %95 = vmatpush.msra.mxu0 %v52
    %96 = vmatpush.msra.mxu0 %v49
    %97 = vmatpush.msra.mxu0 %v46
    %98 = vmatpush.msra.mxu0 %v43
    %99 = vmatmul.f32.gmra.mxu0 %v81
    %v100 = vpop.f32.mrf.mxu0
    %v101 = vadd.f32 0.0, %v100
    %102 = vdwg.mxu0
    %103 = vmatpush.msra.mxu0 0.0
    %104 = vmatpush.msra.mxu0 0.0
    %105 = vmatpush.msra.mxu0 0.0
    %106 = vmatpush.msra.mxu0 0.0
    %107 = vmatpush.msra.mxu0 %v77
    %108 = vmatpush.msra.mxu0 %v74
    %109 = vmatpush.msra.mxu0 %v71
    %110 = vmatpush.msra.mxu0 %v68
    %111 = vmatpush.msra.mxu0 %v65
    %112 = vmatpush.msra.mxu0 %v62
    %113 = vmatpush.msra.mxu0 %v59
    %114 = vmatpush.msra.mxu0 %v56
    %115 = vmatpush.msra.mxu0 %v53
    %116 = vmatpush.msra.mxu0 %v50
    %117 = vmatpush.msra.mxu0 %v47
    %118 = vmatpush.msra.mxu0 %v44
    %119 = vmatmul.f32.gmra.mxu0 %v81
    %v120 = vpop.f32.mrf.mxu0
    %v121 = vadd.f32 0.0, %v120
    %122 = vdwg.mxu0
    %123 = vmatpush.msra.mxu0 0.0
    %124 = vmatpush.msra.mxu0 0.0
    %125 = vmatpush.msra.mxu0 0.0
    %126 = vmatpush.msra.mxu0 0.0
    %127 = vmatpush.msra.mxu0 %v78
    %128 = vmatpush.msra.mxu0 %v75
    %129 = vmatpush.msra.mxu0 %v72
    %130 = vmatpush.msra.mxu0 %v69
    %131 = vmatpush.msra.mxu0 %v66
    %132 = vmatpush.msra.mxu0 %v63
    %133 = vmatpush.msra.mxu0 %v60
    %134 = vmatpush.msra.mxu0 %v57
    %135 = vmatpush.msra.mxu0 %v54
    %136 = vmatpush.msra.mxu0 %v51
    %137 = vmatpush.msra.mxu0 %v48
    %138 = vmatpush.msra.mxu0 %v45
    %139 = vmatmul.f32.gmra.mxu0 %v81
    %v140 = vpop.f32.mrf.mxu0
    %v141 = vadd.f32 0.0, %v140
    %142 = vdwg.mxu0
    %s143 = scalar_lea.vmem [#allocation2], 288
    %v144 = vld [vmem:[%s143] sm:$0xff]
    %v145 = vld [vmem:[%s143 + $0x8] sm:$0xff]
    %v146 = vld [vmem:[%s143 + $0x10] sm:$0xff]
    %v147 = vld [vmem:[%s143 + $0x18] sm:$0xff]
    %v148 = vld [vmem:[%s143 + $0x20] sm:$0xff]
    %v149 = vld [vmem:[%s143 + $0x28] sm:$0xff]
    %v150 = vld [vmem:[%s143 + $0x30] sm:$0xff]
    %v151 = vld [vmem:[%s143 + $0x38] sm:$0xff]
    %v152 = vld [vmem:[%s143 + $0x40] sm:$0xff]
    %v153 = vld [vmem:[%s143 + $0x48] sm:$0xff]
    %v154 = vld [vmem:[%s143 + $0x50] sm:$0xff]
    %v155 = vld [vmem:[%s143 + $0x58] sm:$0xff]
    %v156 = vld [vmem:[%s143 + $0x60] sm:$0xff]
    %v157 = vld [vmem:[%s143 + $0x68] sm:$0xff]
    %v158 = vld [vmem:[%s143 + $0x70] sm:$0xff]
    %v159 = vld [vmem:[%s143 + $0x78] sm:$0xff]
    %v160 = vld [vmem:[%s143 + $0x80] sm:$0xff]
    %v161 = vld [vmem:[%s143 + $0x88] sm:$0xff]
    %v162 = vld [vmem:[%s143 + $0x90] sm:$0xff]
    %v163 = vld [vmem:[%s143 + $0x98] sm:$0xff]
    %v164 = vld [vmem:[%s143 + $0xa0] sm:$0xff]
    %v165 = vld [vmem:[%s143 + $0xa8] sm:$0xff]
    %v166 = vld [vmem:[%s143 + $0xb0] sm:$0xff]
    %v167 = vld [vmem:[%s143 + $0xb8] sm:$0xff]
    %v168 = vld [vmem:[%s143 + $0xc0] sm:$0xff]
    %v169 = vld [vmem:[%s143 + $0xc8] sm:$0xff]
    %v170 = vld [vmem:[%s143 + $0xd0] sm:$0xff]
    %v171 = vld [vmem:[%s143 + $0xd8] sm:$0xff]
    %v172 = vld [vmem:[%s143 + $0xe0] sm:$0xff]
    %v173 = vld [vmem:[%s143 + $0xe8] sm:$0xff]
    %v174 = vld [vmem:[%s143 + $0xf0] sm:$0xff]
    %v175 = vld [vmem:[%s143 + $0xf8] sm:$0xff]
    %v176 = vld [vmem:[%s143 + $0x100] sm:$0xff]
    %v177 = vld [vmem:[%s143 + $0x108] sm:$0xff]
    %v178 = vld [vmem:[%s143 + $0x110] sm:$0xff]
    %v179 = vld [vmem:[%s143 + $0x118] sm:$0xff]
    %180 = vmatpush.msra.mxu0 0.0
    %181 = vmatpush.msra.mxu0 0.0
    %182 = vmatpush.msra.mxu0 0.0
    %183 = vmatpush.msra.mxu0 0.0
    %184 = vmatpush.msra.mxu0 %v177
    %185 = vmatpush.msra.mxu0 %v174
    %186 = vmatpush.msra.mxu0 %v171
    %187 = vmatpush.msra.mxu0 %v168
    %188 = vmatpush.msra.mxu0 %v165
    %189 = vmatpush.msra.mxu0 %v162
    %190 = vmatpush.msra.mxu0 %v159
    %191 = vmatpush.msra.mxu0 %v156
    %192 = vmatpush.msra.mxu0 %v153
    %193 = vmatpush.msra.mxu0 %v150
    %194 = vmatpush.msra.mxu0 %v147
    %195 = vmatpush.msra.mxu0 %v144
    %196 = vmatmul.f32.gmra.mxu0 %v81
    %v197 = vpop.f32.mrf.mxu0
    %v198 = vadd.f32 0.0, %v197
    %199 = vdwg.mxu0
    %200 = vmatpush.msra.mxu0 0.0
    %201 = vmatpush.msra.mxu0 0.0
    %202 = vmatpush.msra.mxu0 0.0
    %203 = vmatpush.msra.mxu0 0.0
    %204 = vmatpush.msra.mxu0 %v178
    %205 = vmatpush.msra.mxu0 %v175
    %206 = vmatpush.msra.mxu0 %v172
    %207 = vmatpush.msra.mxu0 %v169
    %208 = vmatpush.msra.mxu0 %v166
    %209 = vmatpush.msra.mxu0 %v163
    %210 = vmatpush.msra.mxu0 %v160
    %211 = vmatpush.msra.mxu0 %v157
    %212 = vmatpush.msra.mxu0 %v154
    %213 = vmatpush.msra.mxu0 %v151
    %214 = vmatpush.msra.mxu0 %v148
    %215 = vmatpush.msra.mxu0 %v145
    %216 = vmatmul.f32.gmra.mxu0 %v81
    %v217 = vpop.f32.mrf.mxu0
    %v218 = vadd.f32 0.0, %v217
    %219 = vdwg.mxu0
    %220 = vmatpush.msra.mxu0 0.0
    %221 = vmatpush.msra.mxu0 0.0
    %222 = vmatpush.msra.mxu0 0.0
    %223 = vmatpush.msra.mxu0 0.0
    %224 = vmatpush.msra.mxu0 %v179
    %225 = vmatpush.msra.mxu0 %v176
    %226 = vmatpush.msra.mxu0 %v173
    %227 = vmatpush.msra.mxu0 %v170
    %228 = vmatpush.msra.mxu0 %v167
    %229 = vmatpush.msra.mxu0 %v164
    %230 = vmatpush.msra.mxu0 %v161
    %231 = vmatpush.msra.mxu0 %v158
    %232 = vmatpush.msra.mxu0 %v155
    %233 = vmatpush.msra.mxu0 %v152
    %234 = vmatpush.msra.mxu0 %v149
    %235 = vmatpush.msra.mxu0 %v146
    %236 = vmatmul.f32.gmra.mxu0 %v81
    %v237 = vpop.f32.mrf.mxu0
    %v238 = vadd.f32 0.0, %v237
    %239 = vdwg.mxu0
    %v240 = vmul.f32 %v101, %v198
    %v241 = vmul.f32 %v121, %v218
    %v242 = vmul.f32 %v141, %v238
    %243 = vst [vmem:[#allocation7] sm:$0xff] %v240
    %244 = vst [vmem:[#allocation7 + $0x8] sm:$0xff] %v241
    %vm245 = vcmask 654336
    %246 = vst.msk [vmem:[#allocation7 + $0x10] sm:$0xff] %vm245, %v242
    // Predicated region
    $region18: #{tpu_custom_call.1} parent=1 // pred_check
      _
    $region19: #{tpu_custom_call.1} parent=1 // pred_check_branch
      %248 = sbr.rel (0) target = $region21
    $region20: #{tpu_custom_call.1} parent=1 // pred_region
      %250 = vsyncadd [#allocation4], 0
      %s252 = sshll.u32 [#allocation7], 4
      %s253 = int_to_ptr.vmem [resolvable:$true] %s252
      %s254 = sshll.u32 %s2, 4
      %s255 = int_to_ptr.hbm [resolvable:$true] %s254
      %257 = dma.vmem_to_hbm [thread:$0]  %s253, 384, %s255, [#allocation4]
    $region21: #{tpu_custom_call.1} parent=1 // pred_fallthru
      _
    // Predicated region
    $region22: #{tpu_custom_call.1} parent=1 // pred_check
      _
    $region23: #{tpu_custom_call.1} parent=1 // pred_check_branch
      %259 = sbr.rel (0) target = $region25
    $region24: #{tpu_custom_call.1} parent=1 // pred_region
      %261 = dma.done [#allocation4], 384
    $region25: #{tpu_custom_call.1} parent=1 // pred_fallthru
      _
    %262 = vsyncpa [#allocation3], 1
    %263 = vsyncpa [#allocation6], 1
    %264 = vsyncpa [#allocation4], 1

</llo_original>
